<compile_context>
chip_gen: v7x
topology: tpu7x:2x2x1
jax: 0.10.0
libtpu: 0.0.40
codegen_flags: <defaults>
</compile_context>

<pallas_src>
import jax
import jax.numpy as jnp
from jax.experimental import pallas as pl
from jax.experimental.pallas import tpu as pltpu

LANE = 128      # lane width: pad OUT to this for unmasked vst
SUBLANE = 8     # sublane width: pad N to a multiple of this


def linear_hswish_kernel(x_ref, w_ref, b_ref, o_ref):
    # y = x @ W + b   (Linear); operands stay f32, accumulate in f32 on the MXU.
    y = jnp.dot(x_ref[...], w_ref[...], preferred_element_type=jnp.float32)
    y = y + b_ref[...]
    # hardswish-style: y * clamp(y + 3, 0, 6) / 6
    act = jnp.clip(y + 3.0, 0.0, 6.0)
    o_ref[...] = (y * act * (1.0 / 6.0)).astype(o_ref.dtype)


def linear_hswish(x, w, b):
    """x: (N, IN) f32, w: (IN, OUT) f32, b: (OUT,) f32 -> (N, OUT) f32."""
    N, IN = x.shape
    _, OUT = w.shape

    # Pad rows (sublane axis) to a multiple of 8.
    n_pad = (-N) % SUBLANE
    x_p = jnp.pad(x, ((0, n_pad), (0, 0))) if n_pad else x
    Np = N + n_pad

    # Pad output columns (lane axis) to 128 with zeros so the discarded lanes
    # are well-defined (0 * clamp(3,0,6)/6 = 0, no NaN/Inf).
    out_pad = (-OUT) % LANE
    w_p = jnp.pad(w, ((0, 0), (0, out_pad))) if out_pad else w
    b_p = jnp.pad(b, ((0, out_pad),)) if out_pad else b
    OUTp = OUT + out_pad
    b_p = b_p.reshape(1, OUTp)

    out_p = pl.pallas_call(
        linear_hswish_kernel,
        out_shape=jax.ShapeDtypeStruct((Np, OUTp), jnp.float32),
        in_specs=[
            pl.BlockSpec(memory_space=pltpu.VMEM),
            pl.BlockSpec(memory_space=pltpu.VMEM),
            pl.BlockSpec(memory_space=pltpu.VMEM),
        ],
        out_specs=pl.BlockSpec(memory_space=pltpu.VMEM),
    )(x_p, w_p, b_p)

    # Slice back to the logical shape outside the kernel (cheap XLA slice).
    return out_p[:N, :OUT]


if __name__ == "__main__":
    key = jax.random.PRNGKey(0)
    kx, kw, kb = jax.random.split(key, 3)

    N, IN, OUT = 100, 16, 12

    # Deterministic parameter init matching nn.Linear shapes:
    # weight (OUT, IN) = (12, 16), bias (OUT,) = (12,)
    bound = 1.0 / jnp.sqrt(IN)
    w_torch_layout = jax.random.uniform(kw, (OUT, IN), jnp.float32, -bound, bound)
    b = jax.random.uniform(kb, (OUT,), jnp.float32, -bound, bound)

    # Kernel layout: weight as (IN, OUT)
    w = jnp.transpose(w_torch_layout)

    x1 = jax.random.normal(kx, (N, IN), jnp.float32)

    out = linear_hswish(x1, w, b)
    out = jax.block_until_ready(out)

    # Reference check in plain JAX
    y_ref = x1 @ w + b.reshape(1, OUT)
    ref = y_ref * jnp.clip(y_ref + 3.0, 0.0, 6.0) / 6.0
    assert out.shape == (N, OUT), f"bad shape {out.shape}"
    assert jnp.allclose(out, ref, atol=1e-5, rtol=1e-5), "mismatch vs reference"

    print("KERNEL_OK")
</pallas_src>

<mosaic_0001>
module attributes {stable_mosaic.version = 11 : i64} {
  func.func @linear_hswish_kernel(%arg0: memref<104x16xf32, #tpu.memory_space<vmem>>, %arg1: memref<16x128xf32, #tpu.memory_space<vmem>>, %arg2: memref<1x128xf32, #tpu.memory_space<vmem>>, %arg3: memref<104x128xf32, #tpu.memory_space<vmem>>) attributes {dimension_semantics = [], scalar_prefetch = 0 : i64, scratch_operands = 0 : i64, tpu.core_type = #tpu.core_type<tc>} {
    %c0 = arith.constant 0 : index
    %c0_0 = arith.constant 0 : index
    %0 = vector.load %arg0[%c0, %c0_0] : memref<104x16xf32, #tpu.memory_space<vmem>>, vector<104x16xf32>
    %c0_1 = arith.constant 0 : index
    %c0_2 = arith.constant 0 : index
    %1 = vector.load %arg1[%c0_1, %c0_2] : memref<16x128xf32, #tpu.memory_space<vmem>>, vector<16x128xf32>
    %cst = arith.constant dense<0.000000e+00> : vector<104x128xf32>
    %2 = tpu.matmul %0, %1, %cst {dimension_numbers = #tpu.dot_dimension_numbers<[1], [0], [0], [1], [0, 0, 1, 1], [], []>} : vector<104x16xf32>, vector<16x128xf32>, vector<104x128xf32> -> vector<104x128xf32>
    %c0_3 = arith.constant 0 : index
    %c0_4 = arith.constant 0 : index
    %3 = vector.load %arg2[%c0_3, %c0_4] : memref<1x128xf32, #tpu.memory_space<vmem>>, vector<1x128xf32>
    %4 = vector.broadcast %3 : vector<1x128xf32> to vector<104x128xf32>
    %5 = arith.addf %2, %4 : vector<104x128xf32>
    %cst_5 = arith.constant 3.000000e+00 : f32
    %6 = vector.broadcast %cst_5 : f32 to vector<104x128xf32>
    %7 = arith.addf %5, %6 : vector<104x128xf32>
    %cst_6 = arith.constant 0.000000e+00 : f32
    %cst_7 = arith.constant 6.000000e+00 : f32
    %8 = vector.broadcast %cst_6 : f32 to vector<104x128xf32>
    %9 = arith.maximumf %8, %7 : vector<104x128xf32>
    %10 = vector.broadcast %cst_7 : f32 to vector<104x128xf32>
    %11 = arith.minimumf %10, %9 : vector<104x128xf32>
    %12 = arith.mulf %5, %11 : vector<104x128xf32>
    %cst_8 = arith.constant 0.166666672 : f32
    %13 = vector.broadcast %cst_8 : f32 to vector<104x128xf32>
    %14 = arith.mulf %12, %13 : vector<104x128xf32>
    %c0_9 = arith.constant 0 : index
    %c0_10 = arith.constant 0 : index
    %15 = vector.load %arg3[%c0_9, %c0_10] : memref<104x128xf32, #tpu.memory_space<vmem>>, vector<104x128xf32>
    tpu.vector_store %arg3[%c0_9, %c0_10], %14 {strides = array<i32>} : memref<104x128xf32, #tpu.memory_space<vmem>>, vector<104x128xf32>,
    return
  }
}

</mosaic_0001>

<llo_original>
// kernel: tpu_custom_call.1
$region0: #{tpu_custom_call.1}
  #allocation0 [shape = 'u32[]', space=smem, size = 0x4, offset = 0x4, fixed_abs, tag = 'smem constant byte address 0x4 - core index']
  #allocation1 [shape = 'u32[144,128]{1,0:T(1,128)}', space=vmem, size = 0x12000, scoped, tag = 'internal scratch']
  %s0 = inlined_call_operand.vmem [shape: f32[104,16], index: 0, kind: input, shape index: {}]
  %s1 = inlined_call_operand.vmem [shape: f32[16,128], index: 1, kind: input, shape index: {}]
  %s2 = inlined_call_operand.vmem [shape: f32[1,128], index: 2, kind: input, shape index: {}]
  %s3 = inlined_call_operand.hbm [shape: f32[104,128], index: 3, kind: output, shape index: {}]
  %s4 = sld [smem:[#allocation0]]
  $region22: #{tpu_custom_call.1} parent=0
    _
  %s6 = ssub.s32 1, %s4
  %s7 = scalar_select 0, %s6, %s4
  $region1: #{tpu_custom_call.1} parent=0
    #allocation2 [shape = 'u8[53248]{0}', space=vmem, size = 0xd000, scoped, tag = 'output window, operand 0, single buffered']
    #allocation3 [shape = 's32[1]{0}', space=sflag, size = 0x4, scoped, tag = 'scoped memory for tpu_custom_call.1']
    %8 = vsyncpa [#allocation3], 0
    // Predicated region
    $region2: #{tpu_custom_call.1} parent=1 // pred_check
      _
    $region3: #{tpu_custom_call.1} parent=1 // pred_check_branch
      %10 = sbr.rel (0) target = $region5
    $region4: #{tpu_custom_call.1} parent=1 // pred_region
      _
    $region5: #{tpu_custom_call.1} parent=1 // pred_fallthru
      _
    // Predicated region
    $region6: #{tpu_custom_call.1} parent=1 // pred_check
      _
    $region7: #{tpu_custom_call.1} parent=1 // pred_check_branch
      %12 = sbr.rel (0) target = $region9
    $region8: #{tpu_custom_call.1} parent=1 // pred_region
      _
    $region9: #{tpu_custom_call.1} parent=1 // pred_fallthru
      _
    // Predicated region
    $region10: #{tpu_custom_call.1} parent=1 // pred_check
      _
    $region11: #{tpu_custom_call.1} parent=1 // pred_check_branch
      %14 = sbr.rel (0) target = $region13
    $region12: #{tpu_custom_call.1} parent=1 // pred_region
      _
    $region13: #{tpu_custom_call.1} parent=1 // pred_fallthru
      _
    %v15 = vld [vmem:[%s0] sm:$0xff]
    %v16 = vld [vmem:[%s0 + $0x8] sm:$0xff]
    %v17 = vld [vmem:[%s0 + $0x10] sm:$0xff]
    %v18 = vld [vmem:[%s0 + $0x18] sm:$0xff]
    %v19 = vld [vmem:[%s0 + $0x20] sm:$0xff]
    %v20 = vld [vmem:[%s0 + $0x28] sm:$0xff]
    %v21 = vld [vmem:[%s0 + $0x30] sm:$0xff]
    %v22 = vld [vmem:[%s0 + $0x38] sm:$0xff]
    %v23 = vld [vmem:[%s0 + $0x40] sm:$0xff]
    %v24 = vld [vmem:[%s0 + $0x48] sm:$0xff]
    %v25 = vld [vmem:[%s0 + $0x50] sm:$0xff]
    %v26 = vld [vmem:[%s0 + $0x58] sm:$0xff]
    %v27 = vld [vmem:[%s0 + $0x60] sm:$0xff]
    %v28 = vld [vmem:[%s1] sm:$0xff]
    %v29 = vld [vmem:[%s1 + $0x8] sm:$0xff]
    %v30 = vld [vmem:[%s2] sm:$0x1]
    %v32 = vlaneseq
    %v33 = vshrl.u32 %v32, 7
    %v34 = vsub.s32 0, %v33
    %v35 = vrot.slane %v30, %v34
    %vm37 = vcmask 130048
    %v39 = vsel %vm37, %v15, 0
    %v42 = vsel %vm37, %v16, 0
    %v45 = vsel %vm37, %v17, 0
    %v48 = vsel %vm37, %v18, 0
    %v51 = vsel %vm37, %v19, 0
    %v54 = vsel %vm37, %v20, 0
    %v57 = vsel %vm37, %v21, 0
    %v60 = vsel %vm37, %v22, 0
    %v63 = vsel %vm37, %v23, 0
    %v66 = vsel %vm37, %v24, 0
    %v69 = vsel %vm37, %v25, 0
    %v72 = vsel %vm37, %v26, 0
    %v75 = vsel %vm37, %v27, 0
    %77 = vmatprep.subr.mxu0 0.0
    %78 = vmatpush1.msra.mxu0 %v28
    %79 = vmatprep.subr.mxu0 0.0
    %80 = vmatpush1.msra.mxu0 %v29
    %81 = vmatprep.subr.mxu0 0.0
    %82 = vmatpush1.msra.mxu0 0.0
    %83 = vmatprep.subr.mxu0 0.0
    %84 = vmatpush1.msra.mxu0 0.0
    %85 = vmatprep.subr.mxu0 0.0
    %86 = vmatpush1.msra.mxu0 0.0
    %87 = vmatprep.subr.mxu0 0.0
    %88 = vmatpush1.msra.mxu0 0.0
    %89 = vmatprep.subr.mxu0 0.0
    %90 = vmatpush1.msra.mxu0 0.0
    %91 = vmatprep.subr.mxu0 0.0
    %92 = vmatpush1.msra.mxu0 0.0
    %93 = vmatprep.subr.mxu0 0.0
    %94 = vmatpush1.msra.mxu0 0.0
    %95 = vmatprep.subr.mxu0 0.0
    %96 = vmatpush1.msra.mxu0 0.0
    %97 = vmatprep.subr.mxu0 0.0
    %98 = vmatpush1.msra.mxu0 0.0
    %99 = vmatprep.subr.mxu0 0.0
    %100 = vmatpush1.msra.mxu0 0.0
    %101 = vmatprep.subr.mxu0 0.0
    %102 = vmatpush1.msra.mxu0 0.0
    %103 = vmatprep.subr.mxu0 0.0
    %104 = vmatpush1.msra.mxu0 0.0
    %105 = vmatprep.subr.mxu0 0.0
    %106 = vmatpush1.msra.mxu0 0.0
    %107 = vmatprep.subr.mxu0 0.0
    %108 = vmatpush1.msra.mxu0 0.0
    %109 = vmatprep.subr.mxu0 0.0
    %110 = vmatpush1.msra.mxu0 0.0
    %111 = vmatprep.subr.mxu0 0.0
    %112 = vmatpush1.msra.mxu0 0.0
    %113 = vmatprep.subr.mxu0 0.0
    %114 = vmatpush1.msra.mxu0 0.0
    %115 = vmatprep.subr.mxu0 0.0
    %116 = vmatpush1.msra.mxu0 0.0
    %117 = vmatprep.subr.mxu0 0.0
    %118 = vmatpush1.msra.mxu0 0.0
    %119 = vmatprep.subr.mxu0 0.0
    %120 = vmatpush1.msra.mxu0 0.0
    %121 = vmatprep.subr.mxu0 0.0
    %122 = vmatpush1.msra.mxu0 0.0
    %123 = vmatprep.subr.mxu0 0.0
    %124 = vmatpush1.msra.mxu0 0.0
    %125 = vmatprep.subr.mxu0 0.0
    %126 = vmatpush1.msra.mxu0 0.0
    %127 = vmatprep.subr.mxu0 0.0
    %128 = vmatpush1.msra.mxu0 0.0
    %129 = vmatprep.subr.mxu0 0.0
    %130 = vmatpush1.msra.mxu0 0.0
    %131 = vmatprep.subr.mxu0 0.0
    %132 = vmatpush1.msra.mxu0 0.0
    %133 = vmatprep.subr.mxu0 0.0
    %134 = vmatpush1.msra.mxu0 0.0
    %135 = vmatprep.subr.mxu0 0.0
    %136 = vmatpush1.msra.mxu0 0.0
    %137 = vmatprep.subr.mxu0 0.0
    %138 = vmatpush1.msra.mxu0 0.0
    %139 = vmatprep.subr.mxu0 0.0
    %140 = vmatpush1.msra.mxu0 0.0
    %141 = vmatprep.mubr.f32.mxu0 0.0
    %142 = vmatmul.mubr.f32.gmra.mrb[0].mxu0 %v39
    %v143 = vpop.f32.mrb[0].mxu0
    %v144 = vadd.f32 %v35, %v143
    %v145 = vpop.f32.mrb[0].mxu0
    %146 = vmatprep.mubr.f32.mxu0 0.0
    %147 = vmatmul.mubr.f32.gmra.mrb[0].mxu0 %v42
    %v148 = vpop.f32.mrb[0].mxu0
    %v149 = vadd.f32 %v35, %v148
    %v150 = vpop.f32.mrb[0].mxu0
    %151 = vmatprep.mubr.f32.mxu0 0.0
    %152 = vmatmul.mubr.f32.gmra.mrb[0].mxu0 %v45
    %v153 = vpop.f32.mrb[0].mxu0
    %v154 = vadd.f32 %v35, %v153
    %v155 = vpop.f32.mrb[0].mxu0
    %156 = vmatprep.mubr.f32.mxu0 0.0
    %157 = vmatmul.mubr.f32.gmra.mrb[0].mxu0 %v48
    %v158 = vpop.f32.mrb[0].mxu0
    %v159 = vadd.f32 %v35, %v158
    %v160 = vpop.f32.mrb[0].mxu0
    %161 = vmatprep.mubr.f32.mxu0 0.0
    %162 = vmatmul.mubr.f32.gmra.mrb[0].mxu0 %v51
    %v163 = vpop.f32.mrb[0].mxu0
    %v164 = vadd.f32 %v35, %v163
    %v165 = vpop.f32.mrb[0].mxu0
    %166 = vmatprep.mubr.f32.mxu0 0.0
    %167 = vmatmul.mubr.f32.gmra.mrb[0].mxu0 %v54
    %v168 = vpop.f32.mrb[0].mxu0
    %v169 = vadd.f32 %v35, %v168
    %v170 = vpop.f32.mrb[0].mxu0
    %171 = vmatprep.mubr.f32.mxu0 0.0
    %172 = vmatmul.mubr.f32.gmra.mrb[0].mxu0 %v57
    %v173 = vpop.f32.mrb[0].mxu0
    %v174 = vadd.f32 %v35, %v173
    %v175 = vpop.f32.mrb[0].mxu0
    %176 = vmatprep.mubr.f32.mxu0 0.0
    %177 = vmatmul.mubr.f32.gmra.mrb[0].mxu0 %v60
    %v178 = vpop.f32.mrb[0].mxu0
    %v179 = vadd.f32 %v35, %v178
    %v180 = vpop.f32.mrb[0].mxu0
    %181 = vmatprep.mubr.f32.mxu0 0.0
    %182 = vmatmul.mubr.f32.gmra.mrb[0].mxu0 %v63
    %v183 = vpop.f32.mrb[0].mxu0
    %v184 = vadd.f32 %v35, %v183
    %v185 = vpop.f32.mrb[0].mxu0
    %186 = vmatprep.mubr.f32.mxu0 0.0
    %187 = vmatmul.mubr.f32.gmra.mrb[0].mxu0 %v66
    %v188 = vpop.f32.mrb[0].mxu0
    %v189 = vadd.f32 %v35, %v188
    %v190 = vpop.f32.mrb[0].mxu0
    %191 = vmatprep.mubr.f32.mxu0 0.0
    %192 = vmatmul.mubr.f32.gmra.mrb[0].mxu0 %v69
    %v193 = vpop.f32.mrb[0].mxu0
    %v194 = vadd.f32 %v35, %v193
    %v195 = vpop.f32.mrb[0].mxu0
    %196 = vmatprep.mubr.f32.mxu0 0.0
    %197 = vmatmul.mubr.f32.gmra.mrb[0].mxu0 %v72
    %v198 = vpop.f32.mrb[0].mxu0
    %v199 = vadd.f32 %v35, %v198
    %v200 = vpop.f32.mrb[0].mxu0
    %201 = vmatprep.mubr.f32.mxu0 0.0
    %202 = vmatmul.mubr.f32.gmra.mrb[0].mxu0 %v75
    %v203 = vpop.f32.mrb[0].mxu0
    %v204 = vadd.f32 %v35, %v203
    %v205 = vpop.f32.mrb[0].mxu0
    %206 = vdwg.mxu0
    %v207 = vadd.f32 %v144, 3.0
    %v208 = vadd.f32 %v149, 3.0
    %v209 = vadd.f32 %v154, 3.0
    %v210 = vadd.f32 %v159, 3.0
    %v211 = vadd.f32 %v164, 3.0
    %v212 = vadd.f32 %v169, 3.0
    %v213 = vadd.f32 %v174, 3.0
    %v214 = vadd.f32 %v179, 3.0
    %v215 = vadd.f32 %v184, 3.0
    %v216 = vadd.f32 %v189, 3.0
    %v217 = vadd.f32 %v194, 3.0
    %v218 = vadd.f32 %v199, 3.0
    %v219 = vadd.f32 %v204, 3.0
    %v220 = vmax.f32 %v207, 0.0
    %v221 = vmax.f32 %v208, 0.0
    %v222 = vmax.f32 %v209, 0.0
    %v223 = vmax.f32 %v210, 0.0
    %v224 = vmax.f32 %v211, 0.0
    %v225 = vmax.f32 %v212, 0.0
    %v226 = vmax.f32 %v213, 0.0
    %v227 = vmax.f32 %v214, 0.0
    %v228 = vmax.f32 %v215, 0.0
    %v229 = vmax.f32 %v216, 0.0
    %v230 = vmax.f32 %v217, 0.0
    %v231 = vmax.f32 %v218, 0.0
    %v232 = vmax.f32 %v219, 0.0
    %v233 = vmin.f32 %v220, 6.0
    %v234 = vmin.f32 %v221, 6.0
    %v235 = vmin.f32 %v222, 6.0
    %v236 = vmin.f32 %v223, 6.0
    %v237 = vmin.f32 %v224, 6.0
    %v238 = vmin.f32 %v225, 6.0
    %v239 = vmin.f32 %v226, 6.0
    %v240 = vmin.f32 %v227, 6.0
    %v241 = vmin.f32 %v228, 6.0
    %v242 = vmin.f32 %v229, 6.0
    %v243 = vmin.f32 %v230, 6.0
    %v244 = vmin.f32 %v231, 6.0
    %v245 = vmin.f32 %v232, 6.0
    %v246 = vmul.f32 %v144, %v233
    %v247 = vmul.f32 %v149, %v234
    %v248 = vmul.f32 %v154, %v235
    %v249 = vmul.f32 %v159, %v236
    %v250 = vmul.f32 %v164, %v237
    %v251 = vmul.f32 %v169, %v238
    %v252 = vmul.f32 %v174, %v239
    %v253 = vmul.f32 %v179, %v240
    %v254 = vmul.f32 %v184, %v241
    %v255 = vmul.f32 %v189, %v242
    %v256 = vmul.f32 %v194, %v243
    %v257 = vmul.f32 %v199, %v244
    %v258 = vmul.f32 %v204, %v245
    %v259 = vmul.f32 %v246, 0.16666667
    %v260 = vmul.f32 %v247, 0.16666667
    %v261 = vmul.f32 %v248, 0.16666667
    %v262 = vmul.f32 %v249, 0.16666667
    %v263 = vmul.f32 %v250, 0.16666667
    %v264 = vmul.f32 %v251, 0.16666667
    %v265 = vmul.f32 %v252, 0.16666667
    %v266 = vmul.f32 %v253, 0.16666667
    %v267 = vmul.f32 %v254, 0.16666667
    %v268 = vmul.f32 %v255, 0.16666667
    %v269 = vmul.f32 %v256, 0.16666667
    %v270 = vmul.f32 %v257, 0.16666667
    %v271 = vmul.f32 %v258, 0.16666667
    %272 = vst [vmem:[#allocation2] sm:$0xff] %v259
    %273 = vst [vmem:[#allocation2 + $0x8] sm:$0xff] %v260
    %274 = vst [vmem:[#allocation2 + $0x10] sm:$0xff] %v261
    %275 = vst [vmem:[#allocation2 + $0x18] sm:$0xff] %v262
    %276 = vst [vmem:[#allocation2 + $0x20] sm:$0xff] %v263
    %277 = vst [vmem:[#allocation2 + $0x28] sm:$0xff] %v264
    %278 = vst [vmem:[#allocation2 + $0x30] sm:$0xff] %v265
    %279 = vst [vmem:[#allocation2 + $0x38] sm:$0xff] %v266
    %280 = vst [vmem:[#allocation2 + $0x40] sm:$0xff] %v267
    %281 = vst [vmem:[#allocation2 + $0x48] sm:$0xff] %v268
    %282 = vst [vmem:[#allocation2 + $0x50] sm:$0xff] %v269
    %283 = vst [vmem:[#allocation2 + $0x58] sm:$0xff] %v270
    %284 = vst [vmem:[#allocation2 + $0x60] sm:$0xff] %v271
    // Predicated region
    $region14: #{tpu_custom_call.1} parent=1 // pred_check
      _
    $region15: #{tpu_custom_call.1} parent=1 // pred_check_branch
      %286 = sbr.rel (0) target = $region17
    $region16: #{tpu_custom_call.1} parent=1 // pred_region
      %s288 = ssub.s32 1664, 1664
      %289 = vsyncadd [#allocation3], %s288
      %s290 = sshll.u32 [#allocation2], 4
      %s291 = int_to_ptr.vmem [resolvable:$true] %s290
      %296 = dma.vmem_to_hbm [thread:$0]  %s291, 1664, %s3, [#allocation3], 128, 128, 8
    $region17: #{tpu_custom_call.1} parent=1 // pred_fallthru
      _
    // Predicated region
    $region18: #{tpu_custom_call.1} parent=1 // pred_check
      _
    $region19: #{tpu_custom_call.1} parent=1 // pred_check_branch
      %298 = sbr.rel (0) target = $region21
    $region20: #{tpu_custom_call.1} parent=1 // pred_region
      %299 = dma.done [#allocation3], 1664
    $region21: #{tpu_custom_call.1} parent=1 // pred_fallthru
      _
    %300 = vsyncpa [#allocation3], 1

</llo_original>
